<compile_context>
chip_gen: v7x
topology: tpu7x:2x2x1
jax: 0.10.0
libtpu: 0.0.40
codegen_flags: <defaults>
</compile_context>

<pallas_src>
import jax
import jax.numpy as jnp
from jax.experimental import pallas as pl
from jax.experimental.pallas import tpu as pltpu


def _round_up(x, m):
    return (x + m - 1) // m * m


def _ranker_kernel(x1_ref, x2_ref, v1_ref, v2_ref, o_ref):
    # Pure VPU multiply + XLU lane reduce; f32 accumulation. No MXU involvement.
    x1 = x1_ref[...].astype(jnp.float32)   # [TB, E]  (native/bf16 stream -> f32)
    x2 = x2_ref[...].astype(jnp.float32)   # [TB, E]
    v1 = v1_ref[...]                       # [1, E]   (f32, broadcast over rows)
    v2 = v2_ref[...]                       # [1, E]
    s = jnp.sum(x1 * v1 + x2 * v2, axis=-1, keepdims=True)   # [TB, 1] f32
    o_ref[...] = s.astype(o_ref.dtype)


def _tile_budget_and_vmem_limit(E, itemsize, sub):
    """Generation-aware max tile rows + vmem limit."""
    try:
        vmem_cap = int(pltpu.get_tpu_info().vmem_capacity_bytes)
    except Exception:
        vmem_cap = 64 * 1024 * 1024           # conservative: v7x per-TC VMEM

    if vmem_cap >= 96 * 1024 * 1024:          # v5e / v6e: 128 MiB physical VMEM
        tile_budget = 56 * 1024 * 1024
        vmem_limit = 80 * 1024 * 1024
    else:                                     # v7x: 64 MiB per TensorCore
        tile_budget = 40 * 1024 * 1024
        vmem_limit = 48 * 1024 * 1024

    # Per-row VMEM cost of one double-buffered grid step:
    #   2 inputs x 2 buffers x lane-padded(E) x itemsize
    # + 1 output x 2 buffers x 128-lane-padded f32 column.
    e_lanes = _round_up(E, 128)
    row_bytes = 2 * 2 * e_lanes * itemsize + 2 * 128 * 4
    tb_budget = max(sub, (tile_budget // row_bytes) // sub * sub)
    return tb_budget, vmem_limit


def pairwise_ranker(x1, x2, linear_weight, transformation_matrix=None,
                    *, stream_dtype=None, tile_rows=None):
    """Pallas equivalent of PairwiseRanker.forward.

    x1, x2:                [B, E]
    linear_weight:         [1, 2E] (nn.Linear(2E, 1, bias=False).weight)
    transformation_matrix: optional [E, E]
    stream_dtype:          optional dtype to stream x1/x2 in (e.g. bf16);
                           accumulation stays f32.
    tile_rows:             optional tile-size override (testing / sweeps).
    returns:               [B, 1] float32
    """
    B, E = x1.shape
    assert x2.shape == (B, E)
    assert linear_weight.shape == (1, 2 * E)

    # Stream inputs in their native dtype unless an explicit stream dtype is
    # requested (no unconditional f32 upcast -> no extra HBM bytes).
    if stream_dtype is not None:
        x1 = x1.astype(stream_dtype)
        x2 = x2.astype(stream_dtype)
    elif x2.dtype != x1.dtype:
        x2 = x2.astype(x1.dtype)
    itemsize = jnp.dtype(x1.dtype).itemsize

    # Fold the Linear + optional transformation into two [1, E] vectors.
    w = linear_weight.astype(jnp.float32)
    w1 = w[0, :E].reshape(E, 1)
    w2 = w[0, E:].reshape(E, 1)
    if transformation_matrix is not None:
        assert transformation_matrix.shape == (E, E)
        t = transformation_matrix.astype(jnp.float32)
        v1 = (t @ w1).reshape(1, E)            # (x @ T) @ w == x @ (T @ w)
        v2 = (t @ w2).reshape(1, E)
    else:
        v1 = w1.reshape(1, E)
        v2 = w2.reshape(1, E)

    # ---- batch tiling --------------------------------------------------------
    sub = 8 * (4 // itemsize)                  # sublane multiple: f32->8, bf16->16
    tb_budget, vmem_limit = _tile_budget_and_vmem_limit(E, itemsize, sub)

    b_ceil = _round_up(B, sub)
    if tile_rows is not None:
        TB = max(sub, min(tile_rows, b_ceil) // sub * sub)
    elif b_ceil <= tb_budget and b_ceil < 2048:
        TB = B                                 # small batch: one exact block
    else:
        # Big batch: cap the tile so the grid keeps >= 2 steps (v7x megacore),
        # and so the double-buffered working set fits the per-gen VMEM budget.
        TB = min(tb_budget, max(sub, _round_up(pl.cdiv(b_ceil, 2), sub)))
    if TB >= B:
        TB = B                                 # block == array: no overrun at all

    grid = (pl.cdiv(B, TB),)                   # ragged last tile handled by masking

    out = pl.pallas_call(
        _ranker_kernel,
        out_shape=jax.ShapeDtypeStruct((B, 1), jnp.float32),
        grid=grid,
        in_specs=[
            pl.BlockSpec((TB, E), lambda i: (i, 0)),   # x1 tile (streamed)
            pl.BlockSpec((TB, E), lambda i: (i, 0)),   # x2 tile (streamed)
            pl.BlockSpec((1, E), lambda i: (0, 0)),    # folded weight v1 (resident)
            pl.BlockSpec((1, E), lambda i: (0, 0)),    # folded weight v2 (resident)
        ],
        out_specs=pl.BlockSpec((TB, 1), lambda i: (i, 0)),
        compiler_params=pltpu.CompilerParams(
            dimension_semantics=("parallel",),          # megacore sharding on v7x
            vmem_limit_bytes=int(vmem_limit),
        ),
    )(x1, x2, v1, v2)

    return out


if __name__ == "__main__":
    B, E = 8, 32

    key = jax.random.PRNGKey(0)
    k1, k2, kw, kt = jax.random.split(key, 4)

    x1 = jax.random.normal(k1, (B, E), dtype=jnp.float32)
    x2 = jax.random.normal(k2, (B, E), dtype=jnp.float32)
    # Deterministic synthetic parameters (not a checkpoint load).
    linear_weight = jax.random.normal(kw, (1, 2 * E), dtype=jnp.float32) * 0.1
    transformation_matrix = jax.random.normal(kt, (E, E), dtype=jnp.float32) * 0.1

    # 1) With transformation matrix (single exact block).
    out = jax.block_until_ready(
        pairwise_ranker(x1, x2, linear_weight, transformation_matrix))
    tx1 = x1 @ transformation_matrix
    tx2 = x2 @ transformation_matrix
    ref = jnp.concatenate([tx1, tx2], axis=1) @ linear_weight.T
    assert out.shape == (B, 1)
    assert jnp.allclose(out, ref, atol=1e-4, rtol=1e-4)

    # 2) Without transformation matrix.
    out2 = jax.block_until_ready(pairwise_ranker(x1, x2, linear_weight, None))
    ref2 = jnp.concatenate([x1, x2], axis=1) @ linear_weight.T
    assert out2.shape == (B, 1)
    assert jnp.allclose(out2, ref2, atol=1e-4, rtol=1e-4)

    # 3) Multi-tile grid with a ragged batch (partial last block, NO padding),
    #    forced at small shapes by capping the tile size.
    B2 = 20
    kx1, kx2 = jax.random.split(jax.random.PRNGKey(1))
    y1 = jax.random.normal(kx1, (B2, E), dtype=jnp.float32)
    y2 = jax.random.normal(kx2, (B2, E), dtype=jnp.float32)
    ref3 = jnp.concatenate(
        [y1 @ transformation_matrix, y2 @ transformation_matrix], axis=1
    ) @ linear_weight.T
    out3 = jax.block_until_ready(
        pairwise_ranker(y1, y2, linear_weight, transformation_matrix,
                        tile_rows=8))
    assert out3.shape == (B2, 1)
    assert jnp.allclose(out3, ref3, atol=1e-4, rtol=1e-4)

    # 4) Opt-in bf16 streaming (halved HBM traffic; f32 accumulation),
    #    also with a ragged multi-tile grid.
    out4 = jax.block_until_ready(
        pairwise_ranker(y1, y2, linear_weight, transformation_matrix,
                        stream_dtype=jnp.bfloat16, tile_rows=16))
    assert out4.shape == (B2, 1)
    assert jnp.allclose(out4, ref3, atol=3e-2, rtol=3e-2)

    print("KERNEL_OK")
</pallas_src>

<mosaic_0001>
module attributes {stable_mosaic.version = 11 : i64} {
  func.func @_ranker_kernel(%arg0: i32, %arg1: memref<8x32xf32, #tpu.memory_space<vmem>>, %arg2: memref<8x32xf32, #tpu.memory_space<vmem>>, %arg3: memref<1x32xf32, #tpu.memory_space<vmem>>, %arg4: memref<1x32xf32, #tpu.memory_space<vmem>>, %arg5: memref<8x1xf32, #tpu.memory_space<vmem>>) attributes {dimension_semantics = [#tpu.dimension_semantics<parallel>], iteration_bounds = array<i64: 1>, scalar_prefetch = 0 : i64, scratch_operands = 0 : i64, tpu.core_type = #tpu.core_type<tc>, window_params = [{transform_indices = @transform_0, window_bounds = array<i64: 8, 32>}, {transform_indices = @transform_1, window_bounds = array<i64: 8, 32>}, {pipeline_mode = #tpu.pipeline_mode<synchronous>, transform_indices = @transform_2, window_bounds = array<i64: 1, 32>}, {pipeline_mode = #tpu.pipeline_mode<synchronous>, transform_indices = @transform_3, window_bounds = array<i64: 1, 32>}, {transform_indices = @transform_4, window_bounds = array<i64: 8, 1>}]} {
    %c0 = arith.constant 0 : index
    %c0_0 = arith.constant 0 : index
    %0 = vector.load %arg1[%c0, %c0_0] : memref<8x32xf32, #tpu.memory_space<vmem>>, vector<8x32xf32>
    %c0_1 = arith.constant 0 : index
    %c0_2 = arith.constant 0 : index
    %1 = vector.load %arg2[%c0_1, %c0_2] : memref<8x32xf32, #tpu.memory_space<vmem>>, vector<8x32xf32>
    %c0_3 = arith.constant 0 : index
    %c0_4 = arith.constant 0 : index
    %2 = vector.load %arg3[%c0_3, %c0_4] : memref<1x32xf32, #tpu.memory_space<vmem>>, vector<1x32xf32>
    %c0_5 = arith.constant 0 : index
    %c0_6 = arith.constant 0 : index
    %3 = vector.load %arg4[%c0_5, %c0_6] : memref<1x32xf32, #tpu.memory_space<vmem>>, vector<1x32xf32>
    %4 = vector.broadcast %2 : vector<1x32xf32> to vector<8x32xf32>
    %5 = arith.mulf %0, %4 : vector<8x32xf32>
    %6 = vector.broadcast %3 : vector<1x32xf32> to vector<8x32xf32>
    %7 = arith.mulf %1, %6 : vector<8x32xf32>
    %8 = arith.addf %5, %7 : vector<8x32xf32>
    %cst = arith.constant dense<0.000000e+00> : vector<8xf32>
    %9 = vector.multi_reduction <add>, %8, %cst [1] : vector<8x32xf32> to vector<8xf32>
    %10 = vector.shape_cast %9 : vector<8xf32> to vector<8x1xf32>
    %c0_7 = arith.constant 0 : index
    %c0_8 = arith.constant 0 : index
    %11 = vector.load %arg5[%c0_7, %c0_8] : memref<8x1xf32, #tpu.memory_space<vmem>>, vector<8x1xf32>
    tpu.vector_store %arg5[%c0_7, %c0_8], %10 {strides = array<i32>} : memref<8x1xf32, #tpu.memory_space<vmem>>, vector<8x1xf32>,
    return
  }
  func.func @transform_0(%arg0: i32) -> (i32, i32) {
    %c0_i32 = arith.constant 0 : i32
    %c0_i32_0 = arith.constant 0 : i32
    return %arg0, %c0_i32 : i32, i32
  }
  func.func @transform_1(%arg0: i32) -> (i32, i32) {
    %c0_i32 = arith.constant 0 : i32
    %c0_i32_0 = arith.constant 0 : i32
    return %arg0, %c0_i32 : i32, i32
  }
  func.func @transform_2(%arg0: i32) -> (i32, i32) {
    %c0_i32 = arith.constant 0 : i32
    %c0_i32_0 = arith.constant 0 : i32
    %c0_i32_1 = arith.constant 0 : i32
    return %c0_i32, %c0_i32_0 : i32, i32
  }
  func.func @transform_3(%arg0: i32) -> (i32, i32) {
    %c0_i32 = arith.constant 0 : i32
    %c0_i32_0 = arith.constant 0 : i32
    %c0_i32_1 = arith.constant 0 : i32
    return %c0_i32, %c0_i32_0 : i32, i32
  }
  func.func @transform_4(%arg0: i32) -> (i32, i32) {
    %c0_i32 = arith.constant 0 : i32
    %c0_i32_0 = arith.constant 0 : i32
    return %arg0, %c0_i32 : i32, i32
  }
}

</mosaic_0001>

<llo_original>
// kernel: tpu_custom_call.1
$region0: #{tpu_custom_call.1}
  #allocation0 [shape = 'u32[]', space=smem, size = 0x4, offset = 0x4, fixed_abs, tag = 'smem constant byte address 0x4 - core index']
  #allocation1 [shape = 'u32[144,128]{1,0:T(1,128)}', space=vmem, size = 0x12000, scoped, tag = 'internal scratch']
  %s0 = inlined_call_operand.hbm [shape: f32[8,32], index: 0, kind: input, shape index: {}]
  %s1 = inlined_call_operand.hbm [shape: f32[8,32], index: 1, kind: input, shape index: {}]
  %s2 = inlined_call_operand.vmem [shape: f32[1,32], index: 2, kind: input, shape index: {}]
  %s3 = inlined_call_operand.vmem [shape: f32[1,32], index: 3, kind: input, shape index: {}]
  %s4 = inlined_call_operand.vmem [shape: f32[8,1], index: 4, kind: output, shape index: {}]
  %s5 = sld [smem:[#allocation0]]
  $region34: #{tpu_custom_call.1} parent=0
    _
  %s7 = ssub.s32 1, %s5
  %s8 = scalar_select 0, %s7, %s5
  $region1: #{tpu_custom_call.1} parent=0
    #allocation2 [shape = 'u8[4096]{0}', space=vmem, size = 0x1000, scoped, tag = 'input window, operand 0, single buffered']
    #allocation3 [shape = 's32[1]{0}', space=sflag, size = 0x4, scoped, tag = 'scoped memory for tpu_custom_call.1']
    #allocation4 [shape = 'u8[4096]{0}', space=vmem, size = 0x1000, scoped, tag = 'input window, operand 1, single buffered']
    #allocation5 [shape = 's32[1]{0}', space=sflag, size = 0x4, scoped, tag = 'scoped memory for tpu_custom_call.1']
    %9 = vsyncpa [#allocation3], 0
    %10 = vsyncpa [#allocation5], 0
    // Predicated region
    $region2: #{tpu_custom_call.1} parent=1 // pred_check
      _
    $region3: #{tpu_custom_call.1} parent=1 // pred_check_branch
      %12 = sbr.rel (0) target = $region5
    $region4: #{tpu_custom_call.1} parent=1 // pred_region
      %s14 = ssub.s32 128, 128
      %15 = vsyncadd [#allocation3], %s14
      %s17 = sshll.u32 [#allocation2], 4
      %s18 = int_to_ptr.vmem [resolvable:$true] %s17
      %20 = dma.hbm_to_vmem [thread:$0]  %s0, 128, %s18, [#allocation3]
    $region5: #{tpu_custom_call.1} parent=1 // pred_fallthru
      _
    // Predicated region
    $region6: #{tpu_custom_call.1} parent=1 // pred_check
      _
    $region7: #{tpu_custom_call.1} parent=1 // pred_check_branch
      %22 = sbr.rel (0) target = $region9
    $region8: #{tpu_custom_call.1} parent=1 // pred_region
      %s24 = ssub.s32 128, 128
      %25 = vsyncadd [#allocation5], %s24
      %s27 = sshll.u32 [#allocation4], 4
      %s28 = int_to_ptr.vmem [resolvable:$true] %s27
      %30 = dma.hbm_to_vmem [thread:$0]  %s1, 128, %s28, [#allocation5]
    $region9: #{tpu_custom_call.1} parent=1 // pred_fallthru
      _
    // Predicated region
    $region10: #{tpu_custom_call.1} parent=1 // pred_check
      _
    $region11: #{tpu_custom_call.1} parent=1 // pred_check_branch
      %32 = sbr.rel (0) target = $region13
    $region12: #{tpu_custom_call.1} parent=1 // pred_region
      _
    $region13: #{tpu_custom_call.1} parent=1 // pred_fallthru
      _
    // Predicated region
    $region14: #{tpu_custom_call.1} parent=1 // pred_check
      _
    $region15: #{tpu_custom_call.1} parent=1 // pred_check_branch
      %34 = sbr.rel (0) target = $region17
    $region16: #{tpu_custom_call.1} parent=1 // pred_region
      _
    $region17: #{tpu_custom_call.1} parent=1 // pred_fallthru
      _
    // Predicated region
    $region18: #{tpu_custom_call.1} parent=1 // pred_check
      _
    $region19: #{tpu_custom_call.1} parent=1 // pred_check_branch
      %36 = sbr.rel (0) target = $region21
    $region20: #{tpu_custom_call.1} parent=1 // pred_region
      %37 = dma.done [#allocation3], 128
    $region21: #{tpu_custom_call.1} parent=1 // pred_fallthru
      _
    // Predicated region
    $region22: #{tpu_custom_call.1} parent=1 // pred_check
      _
    $region23: #{tpu_custom_call.1} parent=1 // pred_check_branch
      %39 = sbr.rel (0) target = $region25
    $region24: #{tpu_custom_call.1} parent=1 // pred_region
      %40 = dma.done [#allocation5], 128
    $region25: #{tpu_custom_call.1} parent=1 // pred_fallthru
      _
    %v41 = vld [vmem:[#allocation2] sm:$0xff]
    %v42 = vld [vmem:[#allocation4] sm:$0xff]
    %v43 = vld [vmem:[%s2] sm:$0x1]
    %v44 = vld [vmem:[%s3] sm:$0x1]
    %v46 = vlaneseq
    %v47 = vshrl.u32 %v46, 7
    %v48 = vsub.s32 0, %v47
    %v49 = vrot.slane %v43, %v48
    %v51 = vmul.f32 %v41, %v49
    %v53 = vlaneseq
    %v54 = vshrl.u32 %v53, 7
    %v55 = vsub.s32 0, %v54
    %v56 = vrot.slane %v44, %v55
    %v58 = vmul.f32 %v42, %v56
    %v59 = vadd.f32 %v51, %v58
    %vm60 = vcmask 261120
    %v61 = vsel %vm60, %v59, 0.0
    %62 = vadd.xlane.f32.xlu0 %v61
    %v63 = vpop.xlane.xlu0 %62
    %vm64 = vcmask 7168
    %65 = vst.msk [vmem:[%s4] sm:$0xff] %vm64, %v63
    // Predicated region
    $region26: #{tpu_custom_call.1} parent=1 // pred_check
      _
    $region27: #{tpu_custom_call.1} parent=1 // pred_check_branch
      %67 = sbr.rel (0) target = $region29
    $region28: #{tpu_custom_call.1} parent=1 // pred_region
      _
    $region29: #{tpu_custom_call.1} parent=1 // pred_fallthru
      _
    // Predicated region
    $region30: #{tpu_custom_call.1} parent=1 // pred_check
      _
    $region31: #{tpu_custom_call.1} parent=1 // pred_check_branch
      %69 = sbr.rel (0) target = $region33
    $region32: #{tpu_custom_call.1} parent=1 // pred_region
      _
    $region33: #{tpu_custom_call.1} parent=1 // pred_fallthru
      _
    %70 = vsyncpa [#allocation3], 1
    %71 = vsyncpa [#allocation5], 1

</llo_original>
